<compile_context>
chip_gen: v5e
topology: v5e:2x2
jax: 0.10.0
libtpu: 0.0.40
codegen_flags: <defaults>
</compile_context>

<pallas_src>
import jax
import jax.numpy as jnp
from jax.experimental import pallas as pl
from jax.experimental.pallas import tpu as pltpu


def _round_up(n, m):
    return ((n + m - 1) // m) * m


def adapter_kernel(x_ref, wd_ref, bd_ref, wu_ref, bu_ref, o_ref):
    # x_ref: (tm, Hp), wd_ref: (Hp, Bp), bd_ref: (1, Bp), wu_ref: (Bp, Hp), bu_ref: (1, Hp)
    x = x_ref[...]
    # down projection (MXU, f32 accumulate) + bias + ReLU (VPU)
    h = jnp.dot(x, wd_ref[...], preferred_element_type=jnp.float32) + bd_ref[...]
    h = jnp.maximum(h, 0.0)
    # up projection (MXU, f32 accumulate) + bias
    y = jnp.dot(h.astype(wu_ref.dtype), wu_ref[...],
                preferred_element_type=jnp.float32) + bu_ref[...]
    o_ref[...] = y.astype(o_ref.dtype)


def _vmem_capacity_bytes():
    """Per-TensorCore VMEM capacity; conservative fallback is the v7x value."""
    try:
        info = pltpu.get_tpu_info()
        cap = getattr(info, "vmem_capacity_bytes", None)
        if cap:
            return int(cap)
    except Exception:
        pass
    return 64 << 20


def _pick_tile(tm_req, M, Hp, Bp, bytes_x, bytes_w, budget, weight_bufs):
    """Row-tile selection: as big as the VMEM budget allows, >=2 grid steps."""
    tm = max(8, min(_round_up(tm_req, 8), _round_up(M, 8)))

    def est(t):
        io = 2 * (2 * t * Hp) * bytes_x                   # x in + out, double-buffered
        w = weight_bufs * (Hp * Bp + Bp * Hp) * bytes_w   # resident weights
        b = weight_bufs * (Bp + Hp) * 4                   # biases
        return io + w + b

    while tm > 128 and est(tm) > budget:
        tm = _round_up(tm // 2, 8)

    # Guarantee >=2 grid steps so both TensorCores on v7x can be used
    # (essentially free on single-TC chips).
    if M > 8 and pl.cdiv(M, tm) < 2:
        tm = max(8, _round_up(pl.cdiv(M, 2), 8))

    return tm, est(tm)


def adapter(x, w_down, b_down, w_up, b_up, *, tm=512):
    """Fused adapter forward. x: (..., hidden). Weights: (in, out) layout."""
    orig_shape = x.shape
    H = orig_shape[-1]
    B = w_down.shape[1]
    x2 = x.reshape(-1, H)
    M = x2.shape[0]

    # Lane-dense padding of hidden / bottleneck to multiples of 128.
    # NOTE: do NOT pad B beyond 128 to "fill" the 256-wide MXU — mem-bound kernel.
    Hp = _round_up(H, 128)
    Bp = _round_up(B, 128)

    # Pad only when actually misaligned (typical hidden sizes are already x128).
    if Hp != H:
        x2 = jnp.pad(x2, ((0, 0), (0, Hp - H)))
        b_up = jnp.pad(b_up, ((0, Hp - H),))
    if Bp != B:
        b_down = jnp.pad(b_down, ((0, Bp - B),))
    if Hp != H or Bp != B:
        w_down = jnp.pad(w_down, ((0, Hp - H), (0, Bp - B)))
        w_up = jnp.pad(w_up, ((0, Bp - B), (0, Hp - H)))
    bd2 = b_down.reshape(1, Bp)
    bu2 = b_up.reshape(1, Hp)

    bytes_x = jnp.dtype(x.dtype).itemsize
    bytes_w = jnp.dtype(w_down.dtype).itemsize

    cap = _vmem_capacity_bytes()
    if cap >= (128 << 20):            # v5e / v6e: 128 MiB VMEM per TensorCore
        budget, limit_cap = 100 << 20, 110 << 20
    else:                             # v7x: 64 MiB per TensorCore
        budget, limit_cap = 48 << 20, 64 << 20

    # TODO(synk): for very large H (>=8K f32) on v7x, add a second grid axis over
    # the up-proj output columns (tile wu as (Bp, tn), keep h in a (tm, Bp)
    # scratch computed at j==0) so tm need not shrink below 256.

    def run(single_buffer_weights):
        weight_bufs = 1 if single_buffer_weights else 2
        tm_i, working_set = _pick_tile(tm, M, Hp, Bp, bytes_x, bytes_w,
                                       budget, weight_bufs)
        grid = (pl.cdiv(M, tm_i),)   # ragged last block: OOB writes are masked

        if single_buffer_weights:
            def const_spec(shape):
                # Constant index_map -> one fetch; second buffer is pure VMEM waste.
                return pl.BlockSpec(shape, lambda i: (0, 0),
                                    pipeline_mode=pl.Buffered(1))
        else:
            def const_spec(shape):
                return pl.BlockSpec(shape, lambda i: (0, 0))

        flops = 4 * M * Hp * Bp      # two matmuls, 2*M*Hp*Bp each
        bytes_accessed = ((2 * M * Hp) * bytes_x + (2 * Hp * Bp) * bytes_w
                          + (Bp + Hp) * 4)
        vmem_limit = int(max(32 << 20, min(working_set + (8 << 20), limit_cap)))

        return pl.pallas_call(
            adapter_kernel,
            out_shape=jax.ShapeDtypeStruct((M, Hp), x.dtype),
            grid_spec=pltpu.PrefetchScalarGridSpec(
                num_scalar_prefetch=0,
                grid=grid,
                in_specs=[
                    pl.BlockSpec((tm_i, Hp), lambda i: (i, 0)),  # x rows
                    const_spec((Hp, Bp)),                         # down weight (resident)
                    const_spec((1, Bp)),                          # down bias
                    const_spec((Bp, Hp)),                         # up weight (resident)
                    const_spec((1, Hp)),                          # up bias
                ],
                out_specs=pl.BlockSpec((tm_i, Hp), lambda i: (i, 0)),
            ),
            compiler_params=pltpu.CompilerParams(
                dimension_semantics=("parallel",),
                vmem_limit_bytes=vmem_limit,
            ),
            cost_estimate=pl.CostEstimate(
                flops=flops, transcendentals=0, bytes_accessed=bytes_accessed),
        )(x2, w_down, bd2, w_up, bu2)

    try:
        out = run(single_buffer_weights=True)
    except Exception:
        # pipeline_mode=pl.Buffered(1) not supported on this JAX/Mosaic build;
        # fall back to default double-buffered constant specs.
        out = run(single_buffer_weights=False)

    if Hp != H:
        out = out[:, :H]
    return out.reshape(orig_shape)


def adapter_ref(x, w_down, b_down, w_up, b_up):
    h = jnp.maximum(x @ w_down + b_down, 0.0)
    return h @ w_up + b_up


if __name__ == "__main__":
    # Small shapes consistent with the module: hidden=32, bottleneck=64.
    batch, seq, hidden, bottleneck = 2, 8, 32, 64

    key = jax.random.PRNGKey(0)
    kx, kwd, kbd, kwu, kbu = jax.random.split(key, 5)

    x = jax.random.normal(kx, (batch, seq, hidden), dtype=jnp.float32)

    # Deterministic parameter init (uniform, PyTorch Linear default scale).
    lim_d = 1.0 / (hidden ** 0.5)
    lim_u = 1.0 / (bottleneck ** 0.5)
    w_down = jax.random.uniform(kwd, (hidden, bottleneck), jnp.float32, -lim_d, lim_d)
    b_down = jax.random.uniform(kbd, (bottleneck,), jnp.float32, -lim_d, lim_d)
    w_up = jax.random.uniform(kwu, (bottleneck, hidden), jnp.float32, -lim_u, lim_u)
    b_up = jax.random.uniform(kbu, (hidden,), jnp.float32, -lim_u, lim_u)

    out = adapter(x, w_down, b_down, w_up, b_up)
    out = jax.block_until_ready(out)

    expected = adapter_ref(x, w_down, b_down, w_up, b_up)
    assert out.shape == x.shape
    assert jnp.allclose(out, expected, atol=1e-5, rtol=1e-5), "mismatch vs reference"

    print("KERNEL_OK")
</pallas_src>

<mosaic_0001>
module attributes {stable_mosaic.version = 11 : i64} {
  func.func @adapter_kernel(%arg0: i32, %arg1: memref<8x128xf32, #tpu.memory_space<vmem>>, %arg2: memref<128x128xf32, #tpu.memory_space<vmem>>, %arg3: memref<1x128xf32, #tpu.memory_space<vmem>>, %arg4: memref<128x128xf32, #tpu.memory_space<vmem>>, %arg5: memref<1x128xf32, #tpu.memory_space<vmem>>, %arg6: memref<8x128xf32, #tpu.memory_space<vmem>>) attributes {dimension_semantics = [#tpu.dimension_semantics<parallel>], iteration_bounds = array<i64: 2>, scalar_prefetch = 0 : i64, scratch_operands = 0 : i64, tpu.core_type = #tpu.core_type<tc>, window_params = [{transform_indices = @transform_0, window_bounds = array<i64: 8, 128>}, {pipeline_mode = #tpu.pipeline_mode<synchronous>, transform_indices = @transform_1, window_bounds = array<i64: 128, 128>}, {pipeline_mode = #tpu.pipeline_mode<synchronous>, transform_indices = @transform_2, window_bounds = array<i64: 1, 128>}, {pipeline_mode = #tpu.pipeline_mode<synchronous>, transform_indices = @transform_3, window_bounds = array<i64: 128, 128>}, {pipeline_mode = #tpu.pipeline_mode<synchronous>, transform_indices = @transform_4, window_bounds = array<i64: 1, 128>}, {transform_indices = @transform_5, window_bounds = array<i64: 8, 128>}]} {
    %c0 = arith.constant 0 : index
    %c0_0 = arith.constant 0 : index
    %0 = vector.load %arg1[%c0, %c0_0] : memref<8x128xf32, #tpu.memory_space<vmem>>, vector<8x128xf32>
    %c0_1 = arith.constant 0 : index
    %c0_2 = arith.constant 0 : index
    %1 = vector.load %arg2[%c0_1, %c0_2] : memref<128x128xf32, #tpu.memory_space<vmem>>, vector<128x128xf32>
    %cst = arith.constant dense<0.000000e+00> : vector<8x128xf32>
    %2 = tpu.matmul %0, %1, %cst {dimension_numbers = #tpu.dot_dimension_numbers<[1], [0], [0], [1], [0, 0, 1, 1], [], []>} : vector<8x128xf32>, vector<128x128xf32>, vector<8x128xf32> -> vector<8x128xf32>
    %c0_3 = arith.constant 0 : index
    %c0_4 = arith.constant 0 : index
    %3 = vector.load %arg3[%c0_3, %c0_4] : memref<1x128xf32, #tpu.memory_space<vmem>>, vector<1x128xf32>
    %4 = vector.broadcast %3 : vector<1x128xf32> to vector<8x128xf32>
    %5 = arith.addf %2, %4 : vector<8x128xf32>
    %cst_5 = arith.constant 0.000000e+00 : f32
    %6 = vector.broadcast %cst_5 : f32 to vector<8x128xf32>
    %7 = arith.maximumf %5, %6 : vector<8x128xf32>
    %c0_6 = arith.constant 0 : index
    %c0_7 = arith.constant 0 : index
    %8 = vector.load %arg4[%c0_6, %c0_7] : memref<128x128xf32, #tpu.memory_space<vmem>>, vector<128x128xf32>
    %cst_8 = arith.constant dense<0.000000e+00> : vector<8x128xf32>
    %9 = tpu.matmul %7, %8, %cst_8 {dimension_numbers = #tpu.dot_dimension_numbers<[1], [0], [0], [1], [0, 0, 1, 1], [], []>} : vector<8x128xf32>, vector<128x128xf32>, vector<8x128xf32> -> vector<8x128xf32>
    %c0_9 = arith.constant 0 : index
    %c0_10 = arith.constant 0 : index
    %10 = vector.load %arg5[%c0_9, %c0_10] : memref<1x128xf32, #tpu.memory_space<vmem>>, vector<1x128xf32>
    %11 = vector.broadcast %10 : vector<1x128xf32> to vector<8x128xf32>
    %12 = arith.addf %9, %11 : vector<8x128xf32>
    %c0_11 = arith.constant 0 : index
    %c0_12 = arith.constant 0 : index
    %13 = vector.load %arg6[%c0_11, %c0_12] : memref<8x128xf32, #tpu.memory_space<vmem>>, vector<8x128xf32>
    tpu.vector_store %arg6[%c0_11, %c0_12], %12 {strides = array<i32>} : memref<8x128xf32, #tpu.memory_space<vmem>>, vector<8x128xf32>,
    return
  }
  func.func @transform_0(%arg0: i32) -> (i32, i32) {
    %c0_i32 = arith.constant 0 : i32
    %c0_i32_0 = arith.constant 0 : i32
    return %arg0, %c0_i32 : i32, i32
  }
  func.func @transform_1(%arg0: i32) -> (i32, i32) {
    %c0_i32 = arith.constant 0 : i32
    %c0_i32_0 = arith.constant 0 : i32
    %c0_i32_1 = arith.constant 0 : i32
    return %c0_i32, %c0_i32_0 : i32, i32
  }
  func.func @transform_2(%arg0: i32) -> (i32, i32) {
    %c0_i32 = arith.constant 0 : i32
    %c0_i32_0 = arith.constant 0 : i32
    %c0_i32_1 = arith.constant 0 : i32
    return %c0_i32, %c0_i32_0 : i32, i32
  }
  func.func @transform_3(%arg0: i32) -> (i32, i32) {
    %c0_i32 = arith.constant 0 : i32
    %c0_i32_0 = arith.constant 0 : i32
    %c0_i32_1 = arith.constant 0 : i32
    return %c0_i32, %c0_i32_0 : i32, i32
  }
  func.func @transform_4(%arg0: i32) -> (i32, i32) {
    %c0_i32 = arith.constant 0 : i32
    %c0_i32_0 = arith.constant 0 : i32
    %c0_i32_1 = arith.constant 0 : i32
    return %c0_i32, %c0_i32_0 : i32, i32
  }
  func.func @transform_5(%arg0: i32) -> (i32, i32) {
    %c0_i32 = arith.constant 0 : i32
    %c0_i32_0 = arith.constant 0 : i32
    return %arg0, %c0_i32 : i32, i32
  }
}

module attributes {stable_mosaic.version = 11 : i64} {
  func.func @adapter_kernel(%arg0: i32, %arg1: memref<8x128xf32, #tpu.memory_space<vmem>>, %arg2: memref<128x128xf32, #tpu.memory_space<vmem>>, %arg3: memref<1x128xf32, #tpu.memory_space<vmem>>, %arg4: memref<128x128xf32, #tpu.memory_space<vmem>>, %arg5: memref<1x128xf32, #tpu.memory_space<vmem>>, %arg6: memref<8x128xf32, #tpu.memory_space<vmem>>) attributes {dimension_semantics = [#tpu.dimension_semantics<parallel>], iteration_bounds = array<i64: 2>, scalar_prefetch = 0 : i64, scratch_operands = 0 : i64, tpu.core_type = #tpu.core_type<tc>, window_params = [{transform_indices = @transform_0, window_bounds = array<i64: 8, 128>}, {pipeline_mode = #tpu.pipeline_mode<synchronous>, transform_indices = @transform_1, window_bounds = array<i64: 128, 128>}, {pipeline_mode = #tpu.pipeline_mode<synchronous>, transform_indices = @transform_2, window_bounds = array<i64: 1, 128>}, {pipeline_mode = #tpu.pipeline_mode<synchronous>, transform_indices = @transform_3, window_bounds = array<i64: 128, 128>}, {pipeline_mode = #tpu.pipeline_mode<synchronous>, transform_indices = @transform_4, window_bounds = array<i64: 1, 128>}, {transform_indices = @transform_5, window_bounds = array<i64: 8, 128>}]} {
    %c0 = arith.constant 0 : index
    %c0_0 = arith.constant 0 : index
    %0 = vector.load %arg1[%c0, %c0_0] : memref<8x128xf32, #tpu.memory_space<vmem>>, vector<8x128xf32>
    %c0_1 = arith.constant 0 : index
    %c0_2 = arith.constant 0 : index
    %1 = vector.load %arg2[%c0_1, %c0_2] : memref<128x128xf32, #tpu.memory_space<vmem>>, vector<128x128xf32>
    %cst = arith.constant dense<0.000000e+00> : vector<8x128xf32>
    %2 = tpu.matmul %0, %1, %cst {dimension_numbers = #tpu.dot_dimension_numbers<[1], [0], [0], [1], [0, 0, 1, 1], [], []>} : vector<8x128xf32>, vector<128x128xf32>, vector<8x128xf32> -> vector<8x128xf32>
    %c0_3 = arith.constant 0 : index
    %c0_4 = arith.constant 0 : index
    %3 = vector.load %arg3[%c0_3, %c0_4] : memref<1x128xf32, #tpu.memory_space<vmem>>, vector<1x128xf32>
    %4 = vector.broadcast %3 : vector<1x128xf32> to vector<8x128xf32>
    %5 = arith.addf %2, %4 : vector<8x128xf32>
    %cst_5 = arith.constant 0.000000e+00 : f32
    %6 = vector.broadcast %cst_5 : f32 to vector<8x128xf32>
    %7 = arith.maximumf %5, %6 : vector<8x128xf32>
    %c0_6 = arith.constant 0 : index
    %c0_7 = arith.constant 0 : index
    %8 = vector.load %arg4[%c0_6, %c0_7] : memref<128x128xf32, #tpu.memory_space<vmem>>, vector<128x128xf32>
    %cst_8 = arith.constant dense<0.000000e+00> : vector<8x128xf32>
    %9 = tpu.matmul %7, %8, %cst_8 {dimension_numbers = #tpu.dot_dimension_numbers<[1], [0], [0], [1], [0, 0, 1, 1], [], []>} : vector<8x128xf32>, vector<128x128xf32>, vector<8x128xf32> -> vector<8x128xf32>
    %c0_9 = arith.constant 0 : index
    %c0_10 = arith.constant 0 : index
    %10 = vector.load %arg5[%c0_9, %c0_10] : memref<1x128xf32, #tpu.memory_space<vmem>>, vector<1x128xf32>
    %11 = vector.broadcast %10 : vector<1x128xf32> to vector<8x128xf32>
    %12 = arith.addf %9, %11 : vector<8x128xf32>
    %c0_11 = arith.constant 0 : index
    %c0_12 = arith.constant 0 : index
    %13 = vector.load %arg6[%c0_11, %c0_12] : memref<8x128xf32, #tpu.memory_space<vmem>>, vector<8x128xf32>
    tpu.vector_store %arg6[%c0_11, %c0_12], %12 {strides = array<i32>} : memref<8x128xf32, #tpu.memory_space<vmem>>, vector<8x128xf32>,
    return
  }
  func.func @transform_0(%arg0: i32) -> (i32, i32) {
    %c0_i32 = arith.constant 0 : i32
    %c0_i32_0 = arith.constant 0 : i32
    return %arg0, %c0_i32 : i32, i32
  }
  func.func @transform_1(%arg0: i32) -> (i32, i32) {
    %c0_i32 = arith.constant 0 : i32
    %c0_i32_0 = arith.constant 0 : i32
    %c0_i32_1 = arith.constant 0 : i32
    return %c0_i32, %c0_i32_0 : i32, i32
  }
  func.func @transform_2(%arg0: i32) -> (i32, i32) {
    %c0_i32 = arith.constant 0 : i32
    %c0_i32_0 = arith.constant 0 : i32
    %c0_i32_1 = arith.constant 0 : i32
    return %c0_i32, %c0_i32_0 : i32, i32
  }
  func.func @transform_3(%arg0: i32) -> (i32, i32) {
    %c0_i32 = arith.constant 0 : i32
    %c0_i32_0 = arith.constant 0 : i32
    %c0_i32_1 = arith.constant 0 : i32
    return %c0_i32, %c0_i32_0 : i32, i32
  }
  func.func @transform_4(%arg0: i32) -> (i32, i32) {
    %c0_i32 = arith.constant 0 : i32
    %c0_i32_0 = arith.constant 0 : i32
    %c0_i32_1 = arith.constant 0 : i32
    return %c0_i32, %c0_i32_0 : i32, i32
  }
  func.func @transform_5(%arg0: i32) -> (i32, i32) {
    %c0_i32 = arith.constant 0 : i32
    %c0_i32_0 = arith.constant 0 : i32
    return %arg0, %c0_i32 : i32, i32
  }
}

</mosaic_0001>

<llo_original>
// kernel: tpu_custom_call.1
$region0: #{tpu_custom_call.1}
  #allocation0 [shape = 'u32[]', space=smem, size = 0x4, offset = 0x4, fixed_abs, tag = 'smem constant byte address 0x4 - core index']
  #allocation1 [shape = 'u32[72,128]{1,0:T(1,128)}', space=vmem, size = 0x9000, scoped, tag = 'internal scratch']
  %s0 = inlined_call_operand.hbm [shape: f32[16,128], index: 0, kind: input, shape index: {}]
  %s1 = inlined_call_operand.hbm [shape: f32[128,128], index: 1, kind: input, shape index: {}]
  %s2 = inlined_call_operand.vmem [shape: f32[1,128], index: 2, kind: input, shape index: {}]
  %s3 = inlined_call_operand.hbm [shape: f32[128,128], index: 3, kind: input, shape index: {}]
  %s4 = inlined_call_operand.vmem [shape: f32[1,128], index: 4, kind: input, shape index: {}]
  %s5 = inlined_call_operand.hbm [shape: f32[16,128], index: 5, kind: output, shape index: {}]
  %s6 = sld [smem:[#allocation0]]
  $region65: #{tpu_custom_call.1} parent=0
    _
  %s8 = ssub.s32 1, %s6
  %s9 = scalar_select 0, %s8, %s6
  $region1: #{tpu_custom_call.1} parent=0
    #allocation2 [shape = 'u8[8192]{0}', space=vmem, size = 0x2000, scoped, tag = 'input window, operand 0']
    #allocation3 [shape = 's32[2]{0}', space=sflag, size = 0x8, scoped, tag = 'scoped memory for tpu_custom_call.1']
    #allocation4 [shape = 's32[2]{0}', space=sflag, size = 0x8, scoped, tag = 'scoped memory for tpu_custom_call.1']
    #allocation5 [shape = 'u8[65536]{0}', space=vmem, size = 0x10000, scoped, tag = 'input window, operand 1, single buffered']
    #allocation6 [shape = 's32[1]{0}', space=sflag, size = 0x4, scoped, tag = 'scoped memory for tpu_custom_call.1']
    #allocation7 [shape = 'u8[65536]{0}', space=vmem, size = 0x10000, scoped, tag = 'input window, operand 3, single buffered']
    #allocation8 [shape = 'u8[8192]{0}', space=vmem, size = 0x2000, scoped, tag = 'output window, operand 0']
    %10 = vsyncpa [#allocation3], 0
    %s11 = scalar_lea.sflag [#allocation3], 1
    %12 = vsyncpa %s11, 0
    %13 = vsyncpa [#allocation6], 0
    %14 = vsyncpa [#allocation4], 0
    %s15 = scalar_lea.sflag [#allocation4], 1
    %16 = vsyncpa %s15, 0
    loop: start=0, step=1, limit=4
    $region2: #{tpu_custom_call.1} parent=1 // loop_pre_header
      _
    $region3: #{tpu_custom_call.1} parent=1 // loop_header
      %s18 = sphi 0, %s22
      %p19 = scmp.ge.s32.totalorder %s18, 4
      %s28 = sphi 0, %s30
      %s31 = sphi 0, %s28
      %s32 = sphi 0, %s31
      %s48 = sphi 0, %s32
      %s52 = sphi 0, %s52
      %s54 = sphi 0, %s52
      %s55 = sphi 0, %s54
      %s69 = sphi 0, %s55
      %s73 = sphi 0, %s73
      %s75 = sphi 0, %s73
      %s76 = sphi 0, %s75
      %s90 = sphi 0, %s76
      %s94 = sphi 0, %s94
      %s96 = sphi 0, %s94
      %s97 = sphi 0, %s96
      %s111 = sphi 0, %s97
      %s115 = sphi 0, %s115
      %s117 = sphi 0, %s115
      %s118 = sphi 0, %s117
      %s132 = sphi 0, %s118
      %s138 = sphi 0, %s140
      %s141 = sphi 0, %s138
      %s142 = sphi 0, %s141
      %s158 = sphi 0, %s142
    $region4: #{tpu_custom_call.1} parent=1 // loop_header_branch
      %21 = sbr.rel (%p19) target = $region8
    $region5: #{tpu_custom_call.1} parent=1 // loop_body
      %s23 = ssub.s32 %s18, 1
      %s24 = ssub.s32 %s18, 2
      %s25 = sadd.s32 %s18, 1
      %s26 = ssub.s32 %s18, %s25
      %p27 = scmp.eq.s32.totalorder %s26, 0
      %s29 = sadd.s32 %s28, 1
      %s30 = scalar_select %p27, %s28, %s29
      %p33 = pneg %p27
      %p34 = scmp.eq.s32.totalorder %s18, 1
      %p35 = por %p33, %p34
      %p36 = scmp.ne.s32.totalorder %s28, %s31
      %p37 = scmp.eq.s32.totalorder %s18, 0
      %p38 = por %p36, %p37
      %p39 = scmp.ne.s32.totalorder %s28, %s31
      %p40 = scmp.eq.s32.totalorder %s23, 1
      %p41 = por %p39, %p40
      %p42 = scmp.ne.s32.totalorder %s31, %s32
      %p43 = scmp.eq.s32.totalorder %s23, 0
      %p44 = por %p42, %p43
      %p45 = scmp.ne.s32.totalorder %s31, %s32
      %p46 = scmp.eq.s32.totalorder %s24, 1
      %p47 = por %p45, %p46
      %p49 = scmp.ne.s32.totalorder %s32, %s48
      %p50 = scmp.eq.s32.totalorder %s24, 0
      %p51 = por %p49, %p50
      %s53 = sadd.s32 %s52, 1
      %p56 = scmp.eq.s32.totalorder %s18, 1
      %p57 = scmp.ne.s32.totalorder %s52, %s54
      %p58 = scmp.eq.s32.totalorder %s18, 0
      %p59 = por %p57, %p58
      %p60 = scmp.ne.s32.totalorder %s52, %s54
      %p61 = scmp.eq.s32.totalorder %s23, 1
      %p62 = por %p60, %p61
      %p63 = scmp.ne.s32.totalorder %s54, %s55
      %p64 = scmp.eq.s32.totalorder %s23, 0
      %p65 = por %p63, %p64
      %p66 = scmp.ne.s32.totalorder %s54, %s55
      %p67 = scmp.eq.s32.totalorder %s24, 1
      %p68 = por %p66, %p67
      %p70 = scmp.ne.s32.totalorder %s55, %s69
      %p71 = scmp.eq.s32.totalorder %s24, 0
      %p72 = por %p70, %p71
      %s74 = sadd.s32 %s73, 1
      %p77 = scmp.eq.s32.totalorder %s18, 1
      %p78 = scmp.ne.s32.totalorder %s73, %s75
      %p79 = scmp.eq.s32.totalorder %s18, 0
      %p80 = por %p78, %p79
      %p81 = scmp.ne.s32.totalorder %s73, %s75
      %p82 = scmp.eq.s32.totalorder %s23, 1
      %p83 = por %p81, %p82
      %p84 = scmp.ne.s32.totalorder %s75, %s76
      %p85 = scmp.eq.s32.totalorder %s23, 0
      %p86 = por %p84, %p85
      %p87 = scmp.ne.s32.totalorder %s75, %s76
      %p88 = scmp.eq.s32.totalorder %s24, 1
      %p89 = por %p87, %p88
      %p91 = scmp.ne.s32.totalorder %s76, %s90
      %p92 = scmp.eq.s32.totalorder %s24, 0
      %p93 = por %p91, %p92
      %s95 = sadd.s32 %s94, 1
      %p98 = scmp.eq.s32.totalorder %s18, 1
      %p99 = scmp.ne.s32.totalorder %s94, %s96
      %p100 = scmp.eq.s32.totalorder %s18, 0
      %p101 = por %p99, %p100
      %p102 = scmp.ne.s32.totalorder %s94, %s96
      %p103 = scmp.eq.s32.totalorder %s23, 1
      %p104 = por %p102, %p103
      %p105 = scmp.ne.s32.totalorder %s96, %s97
      %p106 = scmp.eq.s32.totalorder %s23, 0
      %p107 = por %p105, %p106
      %p108 = scmp.ne.s32.totalorder %s96, %s97
      %p109 = scmp.eq.s32.totalorder %s24, 1
      %p110 = por %p108, %p109
      %p112 = scmp.ne.s32.totalorder %s97, %s111
      %p113 = scmp.eq.s32.totalorder %s24, 0
      %p114 = por %p112, %p113
      %s116 = sadd.s32 %s115, 1
      %p119 = scmp.eq.s32.totalorder %s18, 1
      %p120 = scmp.ne.s32.totalorder %s115, %s117
      %p121 = scmp.eq.s32.totalorder %s18, 0
      %p122 = por %p120, %p121
      %p123 = scmp.ne.s32.totalorder %s115, %s117
      %p124 = scmp.eq.s32.totalorder %s23, 1
      %p125 = por %p123, %p124
      %p126 = scmp.ne.s32.totalorder %s117, %s118
      %p127 = scmp.eq.s32.totalorder %s23, 0
      %p128 = por %p126, %p127
      %p129 = scmp.ne.s32.totalorder %s117, %s118
      %p130 = scmp.eq.s32.totalorder %s24, 1
      %p131 = por %p129, %p130
      %p133 = scmp.ne.s32.totalorder %s118, %s132
      %p134 = scmp.eq.s32.totalorder %s24, 0
      %p135 = por %p133, %p134
      %s136 = ssub.s32 %s18, %s25
      %p137 = scmp.eq.s32.totalorder %s136, 0
      %s139 = sadd.s32 %s138, 1
      %s140 = scalar_select %p137, %s138, %s139
      %p143 = pneg %p137
      %p144 = scmp.eq.s32.totalorder %s18, 1
      %p145 = por %p143, %p144
      %p146 = scmp.ne.s32.totalorder %s138, %s141
      %p147 = scmp.eq.s32.totalorder %s18, 0
      %p148 = por %p146, %p147
      %p149 = scmp.ne.s32.totalorder %s138, %s141
      %p150 = scmp.eq.s32.totalorder %s23, 1
      %p151 = por %p149, %p150
      %p152 = scmp.ne.s32.totalorder %s141, %s142
      %p153 = scmp.eq.s32.totalorder %s23, 0
      %p154 = por %p152, %p153
      %p155 = scmp.ne.s32.totalorder %s141, %s142
      %p156 = scmp.eq.s32.totalorder %s24, 1
      %p157 = por %p155, %p156
      %p159 = scmp.ne.s32.totalorder %s142, %s158
      %p160 = scmp.eq.s32.totalorder %s24, 0
      %p161 = por %p159, %p160
      %p162 = scmp.le.s32.totalorder 1, %s18
      %p163 = scmp.lt.s32.totalorder %s18, 3
      %p164 = pnand %p162, %p163
      %p165 = pneg %p164
      // Predicated region
      $region9: #{tpu_custom_call.1} parent=5 // pred_check
        _
      $region10: #{tpu_custom_call.1} parent=5 // pred_check_branch
        %167 = sbr.rel (%p164) target = $region12
      $region11: #{tpu_custom_call.1} parent=5 // pred_region
        %s168 = ssub.s32 %s18, 1
        // Predicated region
        $region13: #{tpu_custom_call.1} parent=11 // pred_check
          %p169 = pneg %p65
        $region14: #{tpu_custom_call.1} parent=11 // pred_check_branch
          %171 = sbr.rel (%p169) target = $region16
        $region15: #{tpu_custom_call.1} parent=11 // pred_region
          %173 = vsyncadd [#allocation6], 0
          %s174 = sshll.u32 %s1, 4
          %s175 = int_to_ptr.hbm [resolvable:$true] %s174
          %s176 = sshll.u32 [#allocation5], 4
          %s177 = int_to_ptr.vmem [resolvable:$true] %s176
          %182 = dma.hbm_to_vmem [thread:$0]  %s175, 2048, %s177, [#allocation6], 128, 128, 8
        $region16: #{tpu_custom_call.1} parent=11 // pred_fallthru
          _
        // Predicated region
        $region17: #{tpu_custom_call.1} parent=11 // pred_check
          %p183 = pneg %p86
        $region18: #{tpu_custom_call.1} parent=11 // pred_check_branch
          %185 = sbr.rel (%p183) target = $region20
        $region19: #{tpu_custom_call.1} parent=11 // pred_region
          _
        $region20: #{tpu_custom_call.1} parent=11 // pred_fallthru
          _
        // Predicated region
        $region21: #{tpu_custom_call.1} parent=11 // pred_check
          %p186 = pneg %p107
        $region22: #{tpu_custom_call.1} parent=11 // pred_check_branch
          %188 = sbr.rel (%p186) target = $region24
        $region23: #{tpu_custom_call.1} parent=11 // pred_region
          %190 = vsyncadd [#allocation6], 0
          %s191 = sshll.u32 %s3, 4
          %s192 = int_to_ptr.hbm [resolvable:$true] %s191
          %s193 = sshll.u32 [#allocation7], 4
          %s194 = int_to_ptr.vmem [resolvable:$true] %s193
          %199 = dma.hbm_to_vmem [thread:$0]  %s192, 2048, %s194, [#allocation6], 128, 128, 8
        $region24: #{tpu_custom_call.1} parent=11 // pred_fallthru
          _
        // Predicated region
        $region25: #{tpu_custom_call.1} parent=11 // pred_check
          %p200 = pneg %p128
        $region26: #{tpu_custom_call.1} parent=11 // pred_check_branch
          %202 = sbr.rel (%p200) target = $region28
        $region27: #{tpu_custom_call.1} parent=11 // pred_region
          _
        $region28: #{tpu_custom_call.1} parent=11 // pred_fallthru
          _
      $region12: #{tpu_custom_call.1} parent=5 // pred_fallthru
        _
      %p203 = scmp.lt.s32.totalorder %s18, 2
      // Predicated region
      $region29: #{tpu_custom_call.1} parent=5 // pred_check
        %p204 = pneg %p203
      $region30: #{tpu_custom_call.1} parent=5 // pred_check_branch
        %206 = sbr.rel (%p204) target = $region32
      $region31: #{tpu_custom_call.1} parent=5 // pred_region
        // Predicated region
        $region33: #{tpu_custom_call.1} parent=31 // pred_check
          %p207 = pneg %p38
        $region34: #{tpu_custom_call.1} parent=31 // pred_check_branch
          %209 = sbr.rel (%p207) target = $region36
        $region35: #{tpu_custom_call.1} parent=31 // pred_region
          %s210 = sand.u32 %s28, 1
          %s211 = scalar_lea.sflag [#allocation3], %s210
          %s212 = sand.u32 %s28, 1
          %s213 = smul.addr %s212, 8
          %s214 = scalar_lea.vmem [#allocation2], %s213
          %216 = vsyncadd %s211, 0
          %s217 = smul.addr %s18, 8
          %s218 = scalar_lea.hbm %s0, %s217
          %s220 = sshll.u32 %s218, 4
          %s221 = int_to_ptr.hbm [resolvable:$true] %s220
          %s222 = sshll.u32 %s214, 4
          %s223 = int_to_ptr.vmem [resolvable:$true] %s222
          %225 = dma.hbm_to_vmem [thread:$0]  %s221, 128, %s223, %s211
        $region36: #{tpu_custom_call.1} parent=31 // pred_fallthru
          _
      $region32: #{tpu_custom_call.1} parent=5 // pred_fallthru
        _
      %p226 = scmp.le.s32.totalorder 1, %s18
      %p227 = scmp.lt.s32.totalorder %s18, 3
      %p228 = pnand %p226, %p227
      %p229 = pneg %p228
      // Predicated region
      $region37: #{tpu_custom_call.1} parent=5 // pred_check
        _
      $region38: #{tpu_custom_call.1} parent=5 // pred_check_branch
        %231 = sbr.rel (%p228) target = $region40
      $region39: #{tpu_custom_call.1} parent=5 // pred_region
        %s232 = ssub.s32 %s18, 1
        %s233 = sand.u32 %s31, 1
        %s234 = scalar_lea.sflag [#allocation3], %s233
        %s235 = sand.u32 %s31, 1
        %s236 = smul.addr %s235, 8
        %s237 = scalar_lea.vmem [#allocation2], %s236
        // Predicated region
        $region41: #{tpu_custom_call.1} parent=39 // pred_check
          %p238 = pneg %p44
        $region42: #{tpu_custom_call.1} parent=39 // pred_check_branch
          %240 = sbr.rel (%p238) target = $region44
        $region43: #{tpu_custom_call.1} parent=39 // pred_region
          %242 = dma.done %s234, 128
        $region44: #{tpu_custom_call.1} parent=39 // pred_fallthru
          _
        // Predicated region
        $region45: #{tpu_custom_call.1} parent=39 // pred_check
          %p243 = pneg %p65
        $region46: #{tpu_custom_call.1} parent=39 // pred_check_branch
          %245 = sbr.rel (%p243) target = $region48
        $region47: #{tpu_custom_call.1} parent=39 // pred_region
          %247 = dma.done [#allocation6], 2048
        $region48: #{tpu_custom_call.1} parent=39 // pred_fallthru
          _
        // Predicated region
        $region49: #{tpu_custom_call.1} parent=39 // pred_check
          %p248 = pneg %p107
        $region50: #{tpu_custom_call.1} parent=39 // pred_check_branch
          %250 = sbr.rel (%p248) target = $region52
        $region51: #{tpu_custom_call.1} parent=39 // pred_region
          %252 = dma.done [#allocation6], 2048
        $region52: #{tpu_custom_call.1} parent=39 // pred_fallthru
          _
        %s253 = sand.u32 %s31, 1
        %s254 = scalar_lea.sflag [#allocation3], %s253
        %s255 = sand.u32 %s31, 1
        %s256 = smul.addr %s255, 8
        %s257 = scalar_lea.vmem [#allocation2], %s256
        %p258 = pneg %p44
        %p259 = pneg %p41
        %p260 = pneg %p65
        %p261 = pneg %p62
        %p262 = pneg %p86
        %p263 = pneg %p83
        %p264 = pneg %p107
        %p265 = pneg %p104
        %p266 = pneg %p128
        %p267 = pneg %p125
        %p268 = pneg %p154
        %p269 = pneg %p151
        %s270 = sand.u32 %s141, 1
        %s271 = scalar_lea.sflag [#allocation4], %s270
        %s272 = sand.u32 %s141, 1
        %s273 = smul.addr %s272, 8
        %s274 = scalar_lea.vmem [#allocation8], %s273
        %v275 = vld [vmem:[%s237] sm:$0xff]
        %v276 = vld [vmem:[#allocation5] sm:$0xff]
        %v277 = vld [vmem:[#allocation5 + $0x8] sm:$0xff]
        %v278 = vld [vmem:[#allocation5 + $0x10] sm:$0xff]
        %v279 = vld [vmem:[#allocation5 + $0x18] sm:$0xff]
        %v280 = vld [vmem:[#allocation5 + $0x20] sm:$0xff]
        %v281 = vld [vmem:[#allocation5 + $0x28] sm:$0xff]
        %v282 = vld [vmem:[#allocation5 + $0x30] sm:$0xff]
        %v283 = vld [vmem:[#allocation5 + $0x38] sm:$0xff]
        %v284 = vld [vmem:[#allocation5 + $0x40] sm:$0xff]
        %v285 = vld [vmem:[#allocation5 + $0x48] sm:$0xff]
        %v286 = vld [vmem:[#allocation5 + $0x50] sm:$0xff]
        %v287 = vld [vmem:[#allocation5 + $0x58] sm:$0xff]
        %v288 = vld [vmem:[#allocation5 + $0x60] sm:$0xff]
        %v289 = vld [vmem:[#allocation5 + $0x68] sm:$0xff]
        %v290 = vld [vmem:[#allocation5 + $0x70] sm:$0xff]
        %v291 = vld [vmem:[#allocation5 + $0x78] sm:$0xff]
        %v292 = vld [vmem:[%s2] sm:$0x1]
        %v294 = vperm.slane %v292, 0
        %296 = vmatpush.msra.mxu0 %v291
        %297 = vmatpush.msra.mxu0 %v290
        %298 = vmatpush.msra.mxu0 %v289
        %299 = vmatpush.msra.mxu0 %v288
        %300 = vmatpush.msra.mxu0 %v287
        %301 = vmatpush.msra.mxu0 %v286
        %302 = vmatpush.msra.mxu0 %v285
        %303 = vmatpush.msra.mxu0 %v284
        %304 = vmatpush.msra.mxu0 %v283
        %305 = vmatpush.msra.mxu0 %v282
        %306 = vmatpush.msra.mxu0 %v281
        %307 = vmatpush.msra.mxu0 %v280
        %308 = vmatpush.msra.mxu0 %v279
        %309 = vmatpush.msra.mxu0 %v278
        %310 = vmatpush.msra.mxu0 %v277
        %311 = vmatpush.msra.mxu0 %v276
        %312 = vmatmul.f32.gmra.mxu0 %v275
        %v313 = vpop.f32.mrf.mxu0
        %v314 = vadd.f32 %v294, %v313
        %315 = vdwg.mxu0
        %v316 = vmax.f32 %v314, 0.0
        %v317 = vld [vmem:[#allocation7] sm:$0xff]
        %v318 = vld [vmem:[#allocation7 + $0x8] sm:$0xff]
        %v319 = vld [vmem:[#allocation7 + $0x10] sm:$0xff]
        %v320 = vld [vmem:[#allocation7 + $0x18] sm:$0xff]
        %v321 = vld [vmem:[#allocation7 + $0x20] sm:$0xff]
        %v322 = vld [vmem:[#allocation7 + $0x28] sm:$0xff]
        %v323 = vld [vmem:[#allocation7 + $0x30] sm:$0xff]
        %v324 = vld [vmem:[#allocation7 + $0x38] sm:$0xff]
        %v325 = vld [vmem:[#allocation7 + $0x40] sm:$0xff]
        %v326 = vld [vmem:[#allocation7 + $0x48] sm:$0xff]
        %v327 = vld [vmem:[#allocation7 + $0x50] sm:$0xff]
        %v328 = vld [vmem:[#allocation7 + $0x58] sm:$0xff]
        %v329 = vld [vmem:[#allocation7 + $0x60] sm:$0xff]
        %v330 = vld [vmem:[#allocation7 + $0x68] sm:$0xff]
        %v331 = vld [vmem:[#allocation7 + $0x70] sm:$0xff]
        %v332 = vld [vmem:[#allocation7 + $0x78] sm:$0xff]
        %v333 = vld [vmem:[%s4] sm:$0x1]
        %v335 = vperm.slane %v333, 0
        %337 = vmatpush.msra.mxu0 %v332
        %338 = vmatpush.msra.mxu0 %v331
        %339 = vmatpush.msra.mxu0 %v330
        %340 = vmatpush.msra.mxu0 %v329
        %341 = vmatpush.msra.mxu0 %v328
        %342 = vmatpush.msra.mxu0 %v327
        %343 = vmatpush.msra.mxu0 %v326
        %344 = vmatpush.msra.mxu0 %v325
        %345 = vmatpush.msra.mxu0 %v324
        %346 = vmatpush.msra.mxu0 %v323
        %347 = vmatpush.msra.mxu0 %v322
        %348 = vmatpush.msra.mxu0 %v321
        %349 = vmatpush.msra.mxu0 %v320
        %350 = vmatpush.msra.mxu0 %v319
        %351 = vmatpush.msra.mxu0 %v318
        %352 = vmatpush.msra.mxu0 %v317
        %353 = vmatmul.f32.gmra.mxu0 %v316
        %v354 = vpop.f32.mrf.mxu0
        %v355 = vadd.f32 %v335, %v354
        %356 = vdwg.mxu0
        %357 = vst [vmem:[%s274] sm:$0xff] %v355
        %s358 = sand.u32 %s141, 1
        %s359 = scalar_lea.sflag [#allocation4], %s358
        %s360 = sand.u32 %s141, 1
        %s361 = smul.addr %s360, 8
        %s362 = scalar_lea.vmem [#allocation8], %s361
        // Predicated region
        $region53: #{tpu_custom_call.1} parent=39 // pred_check
          %p363 = pneg %p151
        $region54: #{tpu_custom_call.1} parent=39 // pred_check_branch
          %365 = sbr.rel (%p363) target = $region56
        $region55: #{tpu_custom_call.1} parent=39 // pred_region
          %367 = vsyncadd %s359, 0
          %s368 = smul.addr %s23, 8
          %s369 = scalar_lea.hbm %s5, %s368
          %s371 = sshll.u32 %s362, 4
          %s372 = int_to_ptr.vmem [resolvable:$true] %s371
          %s373 = sshll.u32 %s369, 4
          %s374 = int_to_ptr.hbm [resolvable:$true] %s373
          %376 = dma.vmem_to_hbm [thread:$0]  %s372, 128, %s374, %s359
        $region56: #{tpu_custom_call.1} parent=39 // pred_fallthru
          _
      $region40: #{tpu_custom_call.1} parent=5 // pred_fallthru
        _
      %p377 = scmp.le.s32.totalorder 2, %s18
      // Predicated region
      $region57: #{tpu_custom_call.1} parent=5 // pred_check
        %p378 = pneg %p377
      $region58: #{tpu_custom_call.1} parent=5 // pred_check_branch
        %380 = sbr.rel (%p378) target = $region60
      $region59: #{tpu_custom_call.1} parent=5 // pred_region
        %s381 = ssub.s32 %s18, 2
        // Predicated region
        $region61: #{tpu_custom_call.1} parent=59 // pred_check
          %p382 = pneg %p157
        $region62: #{tpu_custom_call.1} parent=59 // pred_check_branch
          %384 = sbr.rel (%p382) target = $region64
        $region63: #{tpu_custom_call.1} parent=59 // pred_region
          %s385 = sand.u32 %s142, 1
          %s386 = scalar_lea.sflag [#allocation4], %s385
          %s387 = sand.u32 %s142, 1
          %s388 = smul.addr %s387, 8
          %s389 = scalar_lea.vmem [#allocation8], %s388
          %391 = dma.done %s386, 128
        $region64: #{tpu_custom_call.1} parent=59 // pred_fallthru
          _
      $region60: #{tpu_custom_call.1} parent=5 // pred_fallthru
        _
    $region6: #{tpu_custom_call.1} parent=1 // loop_footer
      %s22 = sadd.s32 1, %s18
    $region7: #{tpu_custom_call.1} parent=1 // loop_footer_branch
      %17 = sbr.rel target = $region3
    $region8: #{tpu_custom_call.1} parent=1 // loop_exit
      _
    %392 = vsyncpa [#allocation3], 1
    %s393 = scalar_lea.sflag [#allocation3], 1
    %394 = vsyncpa %s393, 1
    %395 = vsyncpa [#allocation6], 1
    %396 = vsyncpa [#allocation4], 1
    %s397 = scalar_lea.sflag [#allocation4], 1
    %398 = vsyncpa %s397, 1

// kernel: tpu_custom_call.1
$region0: #{tpu_custom_call.1}
  #allocation0 [shape = 'u32[]', space=smem, size = 0x4, offset = 0x4, fixed_abs, tag = 'smem constant byte address 0x4 - core index']
  #allocation1 [shape = 'u32[72,128]{1,0:T(1,128)}', space=vmem, size = 0x9000, scoped, tag = 'internal scratch']
  %s0 = inlined_call_operand.hbm [shape: f32[16,128], index: 0, kind: input, shape index: {}]
  %s1 = inlined_call_operand.hbm [shape: f32[128,128], index: 1, kind: input, shape index: {}]
  %s2 = inlined_call_operand.vmem [shape: f32[1,128], index: 2, kind: input, shape index: {}]
  %s3 = inlined_call_operand.hbm [shape: f32[128,128], index: 3, kind: input, shape index: {}]
  %s4 = inlined_call_operand.vmem [shape: f32[1,128], index: 4, kind: input, shape index: {}]
  %s5 = inlined_call_operand.hbm [shape: f32[16,128], index: 5, kind: output, shape index: {}]
  %s6 = sld [smem:[#allocation0]]
  $region65: #{tpu_custom_call.1} parent=0
    _
  %s8 = ssub.s32 1, %s6
  %s9 = scalar_select 0, %s8, %s6
  $region1: #{tpu_custom_call.1} parent=0
    #allocation2 [shape = 'u8[8192]{0}', space=vmem, size = 0x2000, scoped, tag = 'input window, operand 0']
    #allocation3 [shape = 's32[2]{0}', space=sflag, size = 0x8, scoped, tag = 'scoped memory for tpu_custom_call.1']
    #allocation4 [shape = 's32[2]{0}', space=sflag, size = 0x8, scoped, tag = 'scoped memory for tpu_custom_call.1']
    #allocation5 [shape = 'u8[65536]{0}', space=vmem, size = 0x10000, scoped, tag = 'input window, operand 1, single buffered']
    #allocation6 [shape = 's32[1]{0}', space=sflag, size = 0x4, scoped, tag = 'scoped memory for tpu_custom_call.1']
    #allocation7 [shape = 'u8[65536]{0}', space=vmem, size = 0x10000, scoped, tag = 'input window, operand 3, single buffered']
    #allocation8 [shape = 'u8[8192]{0}', space=vmem, size = 0x2000, scoped, tag = 'output window, operand 0']
    %10 = vsyncpa [#allocation3], 0
    %s11 = scalar_lea.sflag [#allocation3], 1
    %12 = vsyncpa %s11, 0
    %13 = vsyncpa [#allocation6], 0
    %14 = vsyncpa [#allocation4], 0
    %s15 = scalar_lea.sflag [#allocation4], 1
    %16 = vsyncpa %s15, 0
    loop: start=0, step=1, limit=4
    $region2: #{tpu_custom_call.1} parent=1 // loop_pre_header
      _
    $region3: #{tpu_custom_call.1} parent=1 // loop_header
      %s18 = sphi 0, %s22
      %p19 = scmp.ge.s32.totalorder %s18, 4
      %s28 = sphi 0, %s30
      %s31 = sphi 0, %s28
      %s32 = sphi 0, %s31
      %s48 = sphi 0, %s32
      %s52 = sphi 0, %s52
      %s54 = sphi 0, %s52
      %s55 = sphi 0, %s54
      %s69 = sphi 0, %s55
      %s73 = sphi 0, %s73
      %s75 = sphi 0, %s73
      %s76 = sphi 0, %s75
      %s90 = sphi 0, %s76
      %s94 = sphi 0, %s94
      %s96 = sphi 0, %s94
      %s97 = sphi 0, %s96
      %s111 = sphi 0, %s97
      %s115 = sphi 0, %s115
      %s117 = sphi 0, %s115
      %s118 = sphi 0, %s117
      %s132 = sphi 0, %s118
      %s138 = sphi 0, %s140
      %s141 = sphi 0, %s138
      %s142 = sphi 0, %s141
      %s158 = sphi 0, %s142
    $region4: #{tpu_custom_call.1} parent=1 // loop_header_branch
      %21 = sbr.rel (%p19) target = $region8
    $region5: #{tpu_custom_call.1} parent=1 // loop_body
      %s23 = ssub.s32 %s18, 1
      %s24 = ssub.s32 %s18, 2
      %s25 = sadd.s32 %s18, 1
      %s26 = ssub.s32 %s18, %s25
      %p27 = scmp.eq.s32.totalorder %s26, 0
      %s29 = sadd.s32 %s28, 1
      %s30 = scalar_select %p27, %s28, %s29
      %p33 = pneg %p27
      %p34 = scmp.eq.s32.totalorder %s18, 1
      %p35 = por %p33, %p34
      %p36 = scmp.ne.s32.totalorder %s28, %s31
      %p37 = scmp.eq.s32.totalorder %s18, 0
      %p38 = por %p36, %p37
      %p39 = scmp.ne.s32.totalorder %s28, %s31
      %p40 = scmp.eq.s32.totalorder %s23, 1
      %p41 = por %p39, %p40
      %p42 = scmp.ne.s32.totalorder %s31, %s32
      %p43 = scmp.eq.s32.totalorder %s23, 0
      %p44 = por %p42, %p43
      %p45 = scmp.ne.s32.totalorder %s31, %s32
      %p46 = scmp.eq.s32.totalorder %s24, 1
      %p47 = por %p45, %p46
      %p49 = scmp.ne.s32.totalorder %s32, %s48
      %p50 = scmp.eq.s32.totalorder %s24, 0
      %p51 = por %p49, %p50
      %s53 = sadd.s32 %s52, 1
      %p56 = scmp.eq.s32.totalorder %s18, 1
      %p57 = scmp.ne.s32.totalorder %s52, %s54
      %p58 = scmp.eq.s32.totalorder %s18, 0
      %p59 = por %p57, %p58
      %p60 = scmp.ne.s32.totalorder %s52, %s54
      %p61 = scmp.eq.s32.totalorder %s23, 1
      %p62 = por %p60, %p61
      %p63 = scmp.ne.s32.totalorder %s54, %s55
      %p64 = scmp.eq.s32.totalorder %s23, 0
      %p65 = por %p63, %p64
      %p66 = scmp.ne.s32.totalorder %s54, %s55
      %p67 = scmp.eq.s32.totalorder %s24, 1
      %p68 = por %p66, %p67
      %p70 = scmp.ne.s32.totalorder %s55, %s69
      %p71 = scmp.eq.s32.totalorder %s24, 0
      %p72 = por %p70, %p71
      %s74 = sadd.s32 %s73, 1
      %p77 = scmp.eq.s32.totalorder %s18, 1
      %p78 = scmp.ne.s32.totalorder %s73, %s75
      %p79 = scmp.eq.s32.totalorder %s18, 0
      %p80 = por %p78, %p79
      %p81 = scmp.ne.s32.totalorder %s73, %s75
      %p82 = scmp.eq.s32.totalorder %s23, 1
      %p83 = por %p81, %p82
      %p84 = scmp.ne.s32.totalorder %s75, %s76
      %p85 = scmp.eq.s32.totalorder %s23, 0
      %p86 = por %p84, %p85
      %p87 = scmp.ne.s32.totalorder %s75, %s76
      %p88 = scmp.eq.s32.totalorder %s24, 1
      %p89 = por %p87, %p88
      %p91 = scmp.ne.s32.totalorder %s76, %s90
      %p92 = scmp.eq.s32.totalorder %s24, 0
      %p93 = por %p91, %p92
      %s95 = sadd.s32 %s94, 1
      %p98 = scmp.eq.s32.totalorder %s18, 1
      %p99 = scmp.ne.s32.totalorder %s94, %s96
      %p100 = scmp.eq.s32.totalorder %s18, 0
      %p101 = por %p99, %p100
      %p102 = scmp.ne.s32.totalorder %s94, %s96
      %p103 = scmp.eq.s32.totalorder %s23, 1
      %p104 = por %p102, %p103
      %p105 = scmp.ne.s32.totalorder %s96, %s97
      %p106 = scmp.eq.s32.totalorder %s23, 0
      %p107 = por %p105, %p106
      %p108 = scmp.ne.s32.totalorder %s96, %s97
      %p109 = scmp.eq.s32.totalorder %s24, 1
      %p110 = por %p108, %p109
      %p112 = scmp.ne.s32.totalorder %s97, %s111
      %p113 = scmp.eq.s32.totalorder %s24, 0
      %p114 = por %p112, %p113
      %s116 = sadd.s32 %s115, 1
      %p119 = scmp.eq.s32.totalorder %s18, 1
      %p120 = scmp.ne.s32.totalorder %s115, %s117
      %p121 = scmp.eq.s32.totalorder %s18, 0
      %p122 = por %p120, %p121
      %p123 = scmp.ne.s32.totalorder %s115, %s117
      %p124 = scmp.eq.s32.totalorder %s23, 1
      %p125 = por %p123, %p124
      %p126 = scmp.ne.s32.totalorder %s117, %s118
      %p127 = scmp.eq.s32.totalorder %s23, 0
      %p128 = por %p126, %p127
      %p129 = scmp.ne.s32.totalorder %s117, %s118
      %p130 = scmp.eq.s32.totalorder %s24, 1
      %p131 = por %p129, %p130
      %p133 = scmp.ne.s32.totalorder %s118, %s132
      %p134 = scmp.eq.s32.totalorder %s24, 0
      %p135 = por %p133, %p134
      %s136 = ssub.s32 %s18, %s25
      %p137 = scmp.eq.s32.totalorder %s136, 0
      %s139 = sadd.s32 %s138, 1
      %s140 = scalar_select %p137, %s138, %s139
      %p143 = pneg %p137
      %p144 = scmp.eq.s32.totalorder %s18, 1
      %p145 = por %p143, %p144
      %p146 = scmp.ne.s32.totalorder %s138, %s141
      %p147 = scmp.eq.s32.totalorder %s18, 0
      %p148 = por %p146, %p147
      %p149 = scmp.ne.s32.totalorder %s138, %s141
      %p150 = scmp.eq.s32.totalorder %s23, 1
      %p151 = por %p149, %p150
      %p152 = scmp.ne.s32.totalorder %s141, %s142
      %p153 = scmp.eq.s32.totalorder %s23, 0
      %p154 = por %p152, %p153
      %p155 = scmp.ne.s32.totalorder %s141, %s142
      %p156 = scmp.eq.s32.totalorder %s24, 1
      %p157 = por %p155, %p156
      %p159 = scmp.ne.s32.totalorder %s142, %s158
      %p160 = scmp.eq.s32.totalorder %s24, 0
      %p161 = por %p159, %p160
      %p162 = scmp.le.s32.totalorder 1, %s18
      %p163 = scmp.lt.s32.totalorder %s18, 3
      %p164 = pnand %p162, %p163
      %p165 = pneg %p164
      // Predicated region
      $region9: #{tpu_custom_call.1} parent=5 // pred_check
        _
      $region10: #{tpu_custom_call.1} parent=5 // pred_check_branch
        %167 = sbr.rel (%p164) target = $region12
      $region11: #{tpu_custom_call.1} parent=5 // pred_region
        %s168 = ssub.s32 %s18, 1
        // Predicated region
        $region13: #{tpu_custom_call.1} parent=11 // pred_check
          %p169 = pneg %p65
        $region14: #{tpu_custom_call.1} parent=11 // pred_check_branch
          %171 = sbr.rel (%p169) target = $region16
        $region15: #{tpu_custom_call.1} parent=11 // pred_region
          %173 = vsyncadd [#allocation6], 0
          %s174 = sshll.u32 %s1, 4
          %s175 = int_to_ptr.hbm [resolvable:$true] %s174
          %s176 = sshll.u32 [#allocation5], 4
          %s177 = int_to_ptr.vmem [resolvable:$true] %s176
          %182 = dma.hbm_to_vmem [thread:$0]  %s175, 2048, %s177, [#allocation6], 128, 128, 8
        $region16: #{tpu_custom_call.1} parent=11 // pred_fallthru
          _
        // Predicated region
        $region17: #{tpu_custom_call.1} parent=11 // pred_check
          %p183 = pneg %p86
        $region18: #{tpu_custom_call.1} parent=11 // pred_check_branch
          %185 = sbr.rel (%p183) target = $region20
        $region19: #{tpu_custom_call.1} parent=11 // pred_region
          _
        $region20: #{tpu_custom_call.1} parent=11 // pred_fallthru
          _
        // Predicated region
        $region21: #{tpu_custom_call.1} parent=11 // pred_check
          %p186 = pneg %p107
        $region22: #{tpu_custom_call.1} parent=11 // pred_check_branch
          %188 = sbr.rel (%p186) target = $region24
        $region23: #{tpu_custom_call.1} parent=11 // pred_region
          %190 = vsyncadd [#allocation6], 0
          %s191 = sshll.u32 %s3, 4
          %s192 = int_to_ptr.hbm [resolvable:$true] %s191
          %s193 = sshll.u32 [#allocation7], 4
          %s194 = int_to_ptr.vmem [resolvable:$true] %s193
          %199 = dma.hbm_to_vmem [thread:$0]  %s192, 2048, %s194, [#allocation6], 128, 128, 8
        $region24: #{tpu_custom_call.1} parent=11 // pred_fallthru
          _
        // Predicated region
        $region25: #{tpu_custom_call.1} parent=11 // pred_check
          %p200 = pneg %p128
        $region26: #{tpu_custom_call.1} parent=11 // pred_check_branch
          %202 = sbr.rel (%p200) target = $region28
        $region27: #{tpu_custom_call.1} parent=11 // pred_region
          _
        $region28: #{tpu_custom_call.1} parent=11 // pred_fallthru
          _
      $region12: #{tpu_custom_call.1} parent=5 // pred_fallthru
        _
      %p203 = scmp.lt.s32.totalorder %s18, 2
      // Predicated region
      $region29: #{tpu_custom_call.1} parent=5 // pred_check
        %p204 = pneg %p203
      $region30: #{tpu_custom_call.1} parent=5 // pred_check_branch
        %206 = sbr.rel (%p204) target = $region32
      $region31: #{tpu_custom_call.1} parent=5 // pred_region
        // Predicated region
        $region33: #{tpu_custom_call.1} parent=31 // pred_check
          %p207 = pneg %p38
        $region34: #{tpu_custom_call.1} parent=31 // pred_check_branch
          %209 = sbr.rel (%p207) target = $region36
        $region35: #{tpu_custom_call.1} parent=31 // pred_region
          %s210 = sand.u32 %s28, 1
          %s211 = scalar_lea.sflag [#allocation3], %s210
          %s212 = sand.u32 %s28, 1
          %s213 = smul.addr %s212, 8
          %s214 = scalar_lea.vmem [#allocation2], %s213
          %216 = vsyncadd %s211, 0
          %s217 = smul.addr %s18, 8
          %s218 = scalar_lea.hbm %s0, %s217
          %s220 = sshll.u32 %s218, 4
          %s221 = int_to_ptr.hbm [resolvable:$true] %s220
          %s222 = sshll.u32 %s214, 4
          %s223 = int_to_ptr.vmem [resolvable:$true] %s222
          %225 = dma.hbm_to_vmem [thread:$0]  %s221, 128, %s223, %s211
        $region36: #{tpu_custom_call.1} parent=31 // pred_fallthru
          _
      $region32: #{tpu_custom_call.1} parent=5 // pred_fallthru
        _
      %p226 = scmp.le.s32.totalorder 1, %s18
      %p227 = scmp.lt.s32.totalorder %s18, 3
      %p228 = pnand %p226, %p227
      %p229 = pneg %p228
      // Predicated region
      $region37: #{tpu_custom_call.1} parent=5 // pred_check
        _
      $region38: #{tpu_custom_call.1} parent=5 // pred_check_branch
        %231 = sbr.rel (%p228) target = $region40
      $region39: #{tpu_custom_call.1} parent=5 // pred_region
        %s232 = ssub.s32 %s18, 1
        %s233 = sand.u32 %s31, 1
        %s234 = scalar_lea.sflag [#allocation3], %s233
        %s235 = sand.u32 %s31, 1
        %s236 = smul.addr %s235, 8
        %s237 = scalar_lea.vmem [#allocation2], %s236
        // Predicated region
        $region41: #{tpu_custom_call.1} parent=39 // pred_check
          %p238 = pneg %p44
        $region42: #{tpu_custom_call.1} parent=39 // pred_check_branch
          %240 = sbr.rel (%p238) target = $region44
        $region43: #{tpu_custom_call.1} parent=39 // pred_region
          %242 = dma.done %s234, 128
        $region44: #{tpu_custom_call.1} parent=39 // pred_fallthru
          _
        // Predicated region
        $region45: #{tpu_custom_call.1} parent=39 // pred_check
          %p243 = pneg %p65
        $region46: #{tpu_custom_call.1} parent=39 // pred_check_branch
          %245 = sbr.rel (%p243) target = $region48
        $region47: #{tpu_custom_call.1} parent=39 // pred_region
          %247 = dma.done [#allocation6], 2048
        $region48: #{tpu_custom_call.1} parent=39 // pred_fallthru
          _
        // Predicated region
        $region49: #{tpu_custom_call.1} parent=39 // pred_check
          %p248 = pneg %p107
        $region50: #{tpu_custom_call.1} parent=39 // pred_check_branch
          %250 = sbr.rel (%p248) target = $region52
        $region51: #{tpu_custom_call.1} parent=39 // pred_region
          %252 = dma.done [#allocation6], 2048
        $region52: #{tpu_custom_call.1} parent=39 // pred_fallthru
          _
        %s253 = sand.u32 %s31, 1
        %s254 = scalar_lea.sflag [#allocation3], %s253
        %s255 = sand.u32 %s31, 1
        %s256 = smul.addr %s255, 8
        %s257 = scalar_lea.vmem [#allocation2], %s256
        %p258 = pneg %p44
        %p259 = pneg %p41
        %p260 = pneg %p65
        %p261 = pneg %p62
        %p262 = pneg %p86
        %p263 = pneg %p83
        %p264 = pneg %p107
        %p265 = pneg %p104
        %p266 = pneg %p128
        %p267 = pneg %p125
        %p268 = pneg %p154
        %p269 = pneg %p151
        %s270 = sand.u32 %s141, 1
        %s271 = scalar_lea.sflag [#allocation4], %s270
        %s272 = sand.u32 %s141, 1
        %s273 = smul.addr %s272, 8
        %s274 = scalar_lea.vmem [#allocation8], %s273
        %v275 = vld [vmem:[%s237] sm:$0xff]
        %v276 = vld [vmem:[#allocation5] sm:$0xff]
        %v277 = vld [vmem:[#allocation5 + $0x8] sm:$0xff]
        %v278 = vld [vmem:[#allocation5 + $0x10] sm:$0xff]
        %v279 = vld [vmem:[#allocation5 + $0x18] sm:$0xff]
        %v280 = vld [vmem:[#allocation5 + $0x20] sm:$0xff]
        %v281 = vld [vmem:[#allocation5 + $0x28] sm:$0xff]
        %v282 = vld [vmem:[#allocation5 + $0x30] sm:$0xff]
        %v283 = vld [vmem:[#allocation5 + $0x38] sm:$0xff]
        %v284 = vld [vmem:[#allocation5 + $0x40] sm:$0xff]
        %v285 = vld [vmem:[#allocation5 + $0x48] sm:$0xff]
        %v286 = vld [vmem:[#allocation5 + $0x50] sm:$0xff]
        %v287 = vld [vmem:[#allocation5 + $0x58] sm:$0xff]
        %v288 = vld [vmem:[#allocation5 + $0x60] sm:$0xff]
        %v289 = vld [vmem:[#allocation5 + $0x68] sm:$0xff]
        %v290 = vld [vmem:[#allocation5 + $0x70] sm:$0xff]
        %v291 = vld [vmem:[#allocation5 + $0x78] sm:$0xff]
        %v292 = vld [vmem:[%s2] sm:$0x1]
        %v294 = vperm.slane %v292, 0
        %296 = vmatpush.msra.mxu0 %v291
        %297 = vmatpush.msra.mxu0 %v290
        %298 = vmatpush.msra.mxu0 %v289
        %299 = vmatpush.msra.mxu0 %v288
        %300 = vmatpush.msra.mxu0 %v287
        %301 = vmatpush.msra.mxu0 %v286
        %302 = vmatpush.msra.mxu0 %v285
        %303 = vmatpush.msra.mxu0 %v284
        %304 = vmatpush.msra.mxu0 %v283
        %305 = vmatpush.msra.mxu0 %v282
        %306 = vmatpush.msra.mxu0 %v281
        %307 = vmatpush.msra.mxu0 %v280
        %308 = vmatpush.msra.mxu0 %v279
        %309 = vmatpush.msra.mxu0 %v278
        %310 = vmatpush.msra.mxu0 %v277
        %311 = vmatpush.msra.mxu0 %v276
        %312 = vmatmul.f32.gmra.mxu0 %v275
        %v313 = vpop.f32.mrf.mxu0
        %v314 = vadd.f32 %v294, %v313
        %315 = vdwg.mxu0
        %v316 = vmax.f32 %v314, 0.0
        %v317 = vld [vmem:[#allocation7] sm:$0xff]
        %v318 = vld [vmem:[#allocation7 + $0x8] sm:$0xff]
        %v319 = vld [vmem:[#allocation7 + $0x10] sm:$0xff]
        %v320 = vld [vmem:[#allocation7 + $0x18] sm:$0xff]
        %v321 = vld [vmem:[#allocation7 + $0x20] sm:$0xff]
        %v322 = vld [vmem:[#allocation7 + $0x28] sm:$0xff]
        %v323 = vld [vmem:[#allocation7 + $0x30] sm:$0xff]
        %v324 = vld [vmem:[#allocation7 + $0x38] sm:$0xff]
        %v325 = vld [vmem:[#allocation7 + $0x40] sm:$0xff]
        %v326 = vld [vmem:[#allocation7 + $0x48] sm:$0xff]
        %v327 = vld [vmem:[#allocation7 + $0x50] sm:$0xff]
        %v328 = vld [vmem:[#allocation7 + $0x58] sm:$0xff]
        %v329 = vld [vmem:[#allocation7 + $0x60] sm:$0xff]
        %v330 = vld [vmem:[#allocation7 + $0x68] sm:$0xff]
        %v331 = vld [vmem:[#allocation7 + $0x70] sm:$0xff]
        %v332 = vld [vmem:[#allocation7 + $0x78] sm:$0xff]
        %v333 = vld [vmem:[%s4] sm:$0x1]
        %v335 = vperm.slane %v333, 0
        %337 = vmatpush.msra.mxu0 %v332
        %338 = vmatpush.msra.mxu0 %v331
        %339 = vmatpush.msra.mxu0 %v330
        %340 = vmatpush.msra.mxu0 %v329
        %341 = vmatpush.msra.mxu0 %v328
        %342 = vmatpush.msra.mxu0 %v327
        %343 = vmatpush.msra.mxu0 %v326
        %344 = vmatpush.msra.mxu0 %v325
        %345 = vmatpush.msra.mxu0 %v324
        %346 = vmatpush.msra.mxu0 %v323
        %347 = vmatpush.msra.mxu0 %v322
        %348 = vmatpush.msra.mxu0 %v321
        %349 = vmatpush.msra.mxu0 %v320
        %350 = vmatpush.msra.mxu0 %v319
        %351 = vmatpush.msra.mxu0 %v318
        %352 = vmatpush.msra.mxu0 %v317
        %353 = vmatmul.f32.gmra.mxu0 %v316
        %v354 = vpop.f32.mrf.mxu0
        %v355 = vadd.f32 %v335, %v354
        %356 = vdwg.mxu0
        %357 = vst [vmem:[%s274] sm:$0xff] %v355
        %s358 = sand.u32 %s141, 1
        %s359 = scalar_lea.sflag [#allocation4], %s358
        %s360 = sand.u32 %s141, 1
        %s361 = smul.addr %s360, 8
        %s362 = scalar_lea.vmem [#allocation8], %s361
        // Predicated region
        $region53: #{tpu_custom_call.1} parent=39 // pred_check
          %p363 = pneg %p151
        $region54: #{tpu_custom_call.1} parent=39 // pred_check_branch
          %365 = sbr.rel (%p363) target = $region56
        $region55: #{tpu_custom_call.1} parent=39 // pred_region
          %367 = vsyncadd %s359, 0
          %s368 = smul.addr %s23, 8
          %s369 = scalar_lea.hbm %s5, %s368
          %s371 = sshll.u32 %s362, 4
          %s372 = int_to_ptr.vmem [resolvable:$true] %s371
          %s373 = sshll.u32 %s369, 4
          %s374 = int_to_ptr.hbm [resolvable:$true] %s373
          %376 = dma.vmem_to_hbm [thread:$0]  %s372, 128, %s374, %s359
        $region56: #{tpu_custom_call.1} parent=39 // pred_fallthru
          _
      $region40: #{tpu_custom_call.1} parent=5 // pred_fallthru
        _
      %p377 = scmp.le.s32.totalorder 2, %s18
      // Predicated region
      $region57: #{tpu_custom_call.1} parent=5 // pred_check
        %p378 = pneg %p377
      $region58: #{tpu_custom_call.1} parent=5 // pred_check_branch
        %380 = sbr.rel (%p378) target = $region60
      $region59: #{tpu_custom_call.1} parent=5 // pred_region
        %s381 = ssub.s32 %s18, 2
        // Predicated region
        $region61: #{tpu_custom_call.1} parent=59 // pred_check
          %p382 = pneg %p157
        $region62: #{tpu_custom_call.1} parent=59 // pred_check_branch
          %384 = sbr.rel (%p382) target = $region64
        $region63: #{tpu_custom_call.1} parent=59 // pred_region
          %s385 = sand.u32 %s142, 1
          %s386 = scalar_lea.sflag [#allocation4], %s385
          %s387 = sand.u32 %s142, 1
          %s388 = smul.addr %s387, 8
          %s389 = scalar_lea.vmem [#allocation8], %s388
          %391 = dma.done %s386, 128
        $region64: #{tpu_custom_call.1} parent=59 // pred_fallthru
          _
      $region60: #{tpu_custom_call.1} parent=5 // pred_fallthru
        _
    $region6: #{tpu_custom_call.1} parent=1 // loop_footer
      %s22 = sadd.s32 1, %s18
    $region7: #{tpu_custom_call.1} parent=1 // loop_footer_branch
      %17 = sbr.rel target = $region3
    $region8: #{tpu_custom_call.1} parent=1 // loop_exit
      _
    %392 = vsyncpa [#allocation3], 1
    %s393 = scalar_lea.sflag [#allocation3], 1
    %394 = vsyncpa %s393, 1
    %395 = vsyncpa [#allocation6], 1
    %396 = vsyncpa [#allocation4], 1
    %s397 = scalar_lea.sflag [#allocation4], 1
    %398 = vsyncpa %s397, 1

</llo_original>
